<compile_context>
chip_gen: v7x
topology: tpu7x:2x2x1
jax: 0.10.0
libtpu: 0.0.40
codegen_flags: <defaults>
</compile_context>

<pallas_src>
import jax
import jax.numpy as jnp
from jax.experimental import pallas as pl
from jax.experimental.pallas import tpu as pltpu


def _outconv_kernel(w_ref, b_ref, x_ref, o_ref):
    """1x1 conv + bias on one (batch-tile, spatial-tile) block.

    w_ref: (Cout*Cin,) f32 SMEM scalars, row-major [o*Cin + c].
    b_ref: (Cout,)     f32 SMEM scalars.
    x_ref: (B_blk, Cin,  S_blk, 128) VMEM, lane- and sublane-dense.
    o_ref: (B_blk, Cout, S_blk, 128) VMEM.
    """
    cin = x_ref.shape[1]
    cout = o_ref.shape[1]
    for o in range(cout):
        # scalar-weight FMAs on a dense (B, S, 128) tile -- pure VPU work.
        acc = x_ref[:, 0, :, :].astype(jnp.float32) * w_ref[o * cin] + b_ref[o]
        for c in range(1, cin):
            acc = acc + x_ref[:, c, :, :].astype(jnp.float32) * w_ref[o * cin + c]
        o_ref[:, o, :, :] = acc.astype(o_ref.dtype)


def _choose_tiles(n, cin, cout, s_total, itemsize):
    """Pick (batch_tile, sublane_tile); the lane dim is always a dense 128.

    Targets up to 2048 sublanes (256K lanes) per channel per grid step to
    amortize per-step pipeline overhead, batch-blocks small feature maps,
    keeps the double-buffered footprint <= ~16 MiB, and prefers >= 4 grid
    steps when each step would still move several MiB.
    """
    VMEM_BUDGET = 16 * 1024 * 1024
    MAX_SUBLANES = 2048  # 2048 * 128 = 256K lanes per channel per step

    def footprint(b, s):
        return 2 * (cin + cout) * b * s * 128 * itemsize

    # Spatial tile: full extent if small, else a large multiple of 8.
    s_blk = s_total if s_total <= MAX_SUBLANES else MAX_SUBLANES

    # Batch-block when one image's spatial extent cannot fill a tile.
    b_blk = 1
    if s_blk == s_total:
        b_blk = max(1, min(n, MAX_SUBLANES // max(s_total, 1)))

    # Respect the VMEM budget (only shrink S while it stays a multiple of 8).
    while b_blk > 1 and footprint(b_blk, s_blk) > VMEM_BUDGET:
        b_blk //= 2
    while s_blk > 8 and s_blk % 16 == 0 and footprint(b_blk, s_blk) > VMEM_BUDGET:
        s_blk //= 2

    def steps(b, s):
        return (-(-n // b)) * (-(-s_total // s))

    # Megacore: keep >= 4 steps (2 per TC) when each step still moves > 8 MiB.
    while steps(b_blk, s_blk) < 4 and footprint(b_blk, s_blk) > 8 * 1024 * 1024:
        if b_blk > 1:
            b_blk = max(1, b_blk // 2)
        elif s_blk > 8 and s_blk % 16 == 0:
            s_blk //= 2
        else:
            break

    return b_blk, s_blk


def outconv_pallas(x_nchw, weight_oihw, bias_o):
    """1x1 Conv2d forward (nn.Conv2d(in, out, kernel_size=1)).

    x_nchw: (N, Cin, H, W); weight: (Cout, Cin, 1, 1); bias: (Cout,).
    Returns (N, Cout, H, W) in x's dtype.
    """
    N, Cin, H, W = x_nchw.shape
    Cout = weight_oihw.shape[0]
    HW = H * W
    HW_pad = (-(-HW // 128)) * 128          # lane-dense: pad to 128 multiple
    S_total = HW_pad // 128

    x_mat = x_nchw.reshape(N, Cin, HW)      # free, contiguous reshape
    if HW_pad != HW:
        x_mat = jnp.pad(x_mat, ((0, 0), (0, 0), (0, HW_pad - HW)))
    x4 = x_mat.reshape(N, Cin, S_total, 128)

    w_flat = weight_oihw.reshape(Cout * Cin).astype(jnp.float32)   # [o*Cin+c]
    b_vec = bias_o.reshape(Cout).astype(jnp.float32)

    itemsize = jnp.dtype(x_nchw.dtype).itemsize
    B_blk, S_blk = _choose_tiles(N, Cin, Cout, S_total, itemsize)

    grid = (pl.cdiv(N, B_blk), pl.cdiv(S_total, S_blk))

    cost = pl.CostEstimate(
        flops=2 * N * HW_pad * Cin * Cout,
        transcendentals=0,
        bytes_accessed=(N * Cin * HW_pad + N * Cout * HW_pad) * itemsize
        + (Cout * Cin + Cout) * 4,
    )

    out4 = pl.pallas_call(
        _outconv_kernel,
        out_shape=jax.ShapeDtypeStruct((N, Cout, S_total, 128), x_nchw.dtype),
        grid_spec=pltpu.PrefetchScalarGridSpec(
            num_scalar_prefetch=2,          # weights + bias -> SMEM scalars
            grid=grid,
            in_specs=[
                pl.BlockSpec((B_blk, Cin, S_blk, 128),
                             lambda n, t, w_s, b_s: (n, 0, t, 0)),
            ],
            out_specs=pl.BlockSpec((B_blk, Cout, S_blk, 128),
                                   lambda n, t, w_s, b_s: (n, 0, t, 0)),
        ),
        compiler_params=pltpu.CompilerParams(
            dimension_semantics=("parallel", "parallel"),
            vmem_limit_bytes=32 * 1024 * 1024,
        ),
        cost_estimate=cost,
    )(w_flat, b_vec, x4)

    out = out4.reshape(N, Cout, HW_pad)
    if HW_pad != HW:
        out = out[:, :, :HW]
    return out.reshape(N, Cout, H, W)


def _reference(x, weight, bias):
    Cout, Cin = weight.shape[0], weight.shape[1]
    return (jnp.einsum("nchw,oc->nohw", x, weight.reshape(Cout, Cin))
            + bias.reshape(1, Cout, 1, 1))


if __name__ == "__main__":
    key = jax.random.PRNGKey(0)
    kx, kw, kb, kx2 = jax.random.split(key, 4)

    N, Cin, H, W = 2, 4, 16, 16
    Cout = 3

    x = jax.random.normal(kx, (N, Cin, H, W), dtype=jnp.float32)
    weight = jax.random.normal(kw, (Cout, Cin, 1, 1), dtype=jnp.float32) * 0.1
    bias = jax.random.normal(kb, (Cout,), dtype=jnp.float32) * 0.1

    out = jax.block_until_ready(outconv_pallas(x, weight, bias))
    ref = _reference(x, weight, bias)
    assert out.shape == (N, Cout, H, W)
    assert jnp.allclose(out, ref, atol=1e-5, rtol=1e-5)

    # Second case: H*W not a multiple of 128 (exercises the padded-lane path).
    H2 = W2 = 10
    x2 = jax.random.normal(kx2, (N, Cin, H2, W2), dtype=jnp.float32)
    out2 = jax.block_until_ready(outconv_pallas(x2, weight, bias))
    ref2 = _reference(x2, weight, bias)
    assert out2.shape == (N, Cout, H2, W2)
    assert jnp.allclose(out2, ref2, atol=1e-5, rtol=1e-5)

    print("KERNEL_OK")
</pallas_src>

<mosaic_0001>
module attributes {stable_mosaic.version = 11 : i64} {
  func.func @_outconv_kernel(%arg0: i32, %arg1: i32, %arg2: memref<12xf32, #tpu.memory_space<smem>>, %arg3: memref<3xf32, #tpu.memory_space<smem>>, %arg4: memref<2x4x2x128xf32, #tpu.memory_space<vmem>>, %arg5: memref<2x3x2x128xf32, #tpu.memory_space<vmem>>) attributes {dimension_semantics = [#tpu.dimension_semantics<parallel>, #tpu.dimension_semantics<parallel>], iteration_bounds = array<i64: 1, 1>, scalar_prefetch = 2 : i64, scratch_operands = 0 : i64, tpu.core_type = #tpu.core_type<tc>, window_params = [{transform_indices = @transform_0, window_bounds = array<i64: 2, 4, 2, 128>}, {transform_indices = @transform_1, window_bounds = array<i64: 2, 3, 2, 128>}]} {
    %c0 = arith.constant 0 : index
    %c0_0 = arith.constant 0 : index
    %c0_1 = arith.constant 0 : index
    %c0_2 = arith.constant 0 : index
    %0 = vector.load %arg4[%c0, %c0_0, %c0_1, %c0_2] : memref<2x4x2x128xf32, #tpu.memory_space<vmem>>, vector<2x1x2x128xf32>
    %1 = vector.shape_cast %0 : vector<2x1x2x128xf32> to vector<2x2x128xf32>
    %c0_3 = arith.constant 0 : index
    %2 = memref.load %arg2[%c0_3] : memref<12xf32, #tpu.memory_space<smem>>
    %3 = vector.broadcast %2 : f32 to vector<2x2x128xf32>
    %4 = arith.mulf %1, %3 : vector<2x2x128xf32>
    %c0_4 = arith.constant 0 : index
    %5 = memref.load %arg3[%c0_4] : memref<3xf32, #tpu.memory_space<smem>>
    %6 = vector.broadcast %5 : f32 to vector<2x2x128xf32>
    %7 = arith.addf %4, %6 : vector<2x2x128xf32>
    %c0_5 = arith.constant 0 : index
    %c1 = arith.constant 1 : index
    %c0_6 = arith.constant 0 : index
    %c0_7 = arith.constant 0 : index
    %8 = vector.load %arg4[%c0_5, %c1, %c0_6, %c0_7] : memref<2x4x2x128xf32, #tpu.memory_space<vmem>>, vector<2x1x2x128xf32>
    %9 = vector.shape_cast %8 : vector<2x1x2x128xf32> to vector<2x2x128xf32>
    %c1_8 = arith.constant 1 : index
    %10 = memref.load %arg2[%c1_8] : memref<12xf32, #tpu.memory_space<smem>>
    %11 = vector.broadcast %10 : f32 to vector<2x2x128xf32>
    %12 = arith.mulf %9, %11 : vector<2x2x128xf32>
    %13 = arith.addf %7, %12 : vector<2x2x128xf32>
    %c0_9 = arith.constant 0 : index
    %c2 = arith.constant 2 : index
    %c0_10 = arith.constant 0 : index
    %c0_11 = arith.constant 0 : index
    %14 = vector.load %arg4[%c0_9, %c2, %c0_10, %c0_11] : memref<2x4x2x128xf32, #tpu.memory_space<vmem>>, vector<2x1x2x128xf32>
    %15 = vector.shape_cast %14 : vector<2x1x2x128xf32> to vector<2x2x128xf32>
    %c2_12 = arith.constant 2 : index
    %16 = memref.load %arg2[%c2_12] : memref<12xf32, #tpu.memory_space<smem>>
    %17 = vector.broadcast %16 : f32 to vector<2x2x128xf32>
    %18 = arith.mulf %15, %17 : vector<2x2x128xf32>
    %19 = arith.addf %13, %18 : vector<2x2x128xf32>
    %c0_13 = arith.constant 0 : index
    %c3 = arith.constant 3 : index
    %c0_14 = arith.constant 0 : index
    %c0_15 = arith.constant 0 : index
    %20 = vector.load %arg4[%c0_13, %c3, %c0_14, %c0_15] : memref<2x4x2x128xf32, #tpu.memory_space<vmem>>, vector<2x1x2x128xf32>
    %21 = vector.shape_cast %20 : vector<2x1x2x128xf32> to vector<2x2x128xf32>
    %c3_16 = arith.constant 3 : index
    %22 = memref.load %arg2[%c3_16] : memref<12xf32, #tpu.memory_space<smem>>
    %23 = vector.broadcast %22 : f32 to vector<2x2x128xf32>
    %24 = arith.mulf %21, %23 : vector<2x2x128xf32>
    %25 = arith.addf %19, %24 : vector<2x2x128xf32>
    %c0_17 = arith.constant 0 : index
    %c0_18 = arith.constant 0 : index
    %c0_19 = arith.constant 0 : index
    %c0_20 = arith.constant 0 : index
    %26 = vector.load %arg5[%c0_17, %c0_18, %c0_19, %c0_20] : memref<2x3x2x128xf32, #tpu.memory_space<vmem>>, vector<2x1x2x128xf32>
    %27 = vector.shape_cast %26 : vector<2x1x2x128xf32> to vector<2x2x128xf32>
    %28 = vector.shape_cast %25 : vector<2x2x128xf32> to vector<2x1x2x128xf32>
    tpu.vector_store %arg5[%c0_17, %c0_18, %c0_19, %c0_20], %28 {strides = array<i32>} : memref<2x3x2x128xf32, #tpu.memory_space<vmem>>, vector<2x1x2x128xf32>,
    %c0_21 = arith.constant 0 : index
    %c0_22 = arith.constant 0 : index
    %c0_23 = arith.constant 0 : index
    %c0_24 = arith.constant 0 : index
    %29 = vector.load %arg4[%c0_21, %c0_22, %c0_23, %c0_24] : memref<2x4x2x128xf32, #tpu.memory_space<vmem>>, vector<2x1x2x128xf32>
    %30 = vector.shape_cast %29 : vector<2x1x2x128xf32> to vector<2x2x128xf32>
    %c4 = arith.constant 4 : index
    %31 = memref.load %arg2[%c4] : memref<12xf32, #tpu.memory_space<smem>>
    %32 = vector.broadcast %31 : f32 to vector<2x2x128xf32>
    %33 = arith.mulf %30, %32 : vector<2x2x128xf32>
    %c1_25 = arith.constant 1 : index
    %34 = memref.load %arg3[%c1_25] : memref<3xf32, #tpu.memory_space<smem>>
    %35 = vector.broadcast %34 : f32 to vector<2x2x128xf32>
    %36 = arith.addf %33, %35 : vector<2x2x128xf32>
    %c0_26 = arith.constant 0 : index
    %c1_27 = arith.constant 1 : index
    %c0_28 = arith.constant 0 : index
    %c0_29 = arith.constant 0 : index
    %37 = vector.load %arg4[%c0_26, %c1_27, %c0_28, %c0_29] : memref<2x4x2x128xf32, #tpu.memory_space<vmem>>, vector<2x1x2x128xf32>
    %38 = vector.shape_cast %37 : vector<2x1x2x128xf32> to vector<2x2x128xf32>
    %c5 = arith.constant 5 : index
    %39 = memref.load %arg2[%c5] : memref<12xf32, #tpu.memory_space<smem>>
    %40 = vector.broadcast %39 : f32 to vector<2x2x128xf32>
    %41 = arith.mulf %38, %40 : vector<2x2x128xf32>
    %42 = arith.addf %36, %41 : vector<2x2x128xf32>
    %c0_30 = arith.constant 0 : index
    %c2_31 = arith.constant 2 : index
    %c0_32 = arith.constant 0 : index
    %c0_33 = arith.constant 0 : index
    %43 = vector.load %arg4[%c0_30, %c2_31, %c0_32, %c0_33] : memref<2x4x2x128xf32, #tpu.memory_space<vmem>>, vector<2x1x2x128xf32>
    %44 = vector.shape_cast %43 : vector<2x1x2x128xf32> to vector<2x2x128xf32>
    %c6 = arith.constant 6 : index
    %45 = memref.load %arg2[%c6] : memref<12xf32, #tpu.memory_space<smem>>
    %46 = vector.broadcast %45 : f32 to vector<2x2x128xf32>
    %47 = arith.mulf %44, %46 : vector<2x2x128xf32>
    %48 = arith.addf %42, %47 : vector<2x2x128xf32>
    %c0_34 = arith.constant 0 : index
    %c3_35 = arith.constant 3 : index
    %c0_36 = arith.constant 0 : index
    %c0_37 = arith.constant 0 : index
    %49 = vector.load %arg4[%c0_34, %c3_35, %c0_36, %c0_37] : memref<2x4x2x128xf32, #tpu.memory_space<vmem>>, vector<2x1x2x128xf32>
    %50 = vector.shape_cast %49 : vector<2x1x2x128xf32> to vector<2x2x128xf32>
    %c7 = arith.constant 7 : index
    %51 = memref.load %arg2[%c7] : memref<12xf32, #tpu.memory_space<smem>>
    %52 = vector.broadcast %51 : f32 to vector<2x2x128xf32>
    %53 = arith.mulf %50, %52 : vector<2x2x128xf32>
    %54 = arith.addf %48, %53 : vector<2x2x128xf32>
    %c0_38 = arith.constant 0 : index
    %c1_39 = arith.constant 1 : index
    %c0_40 = arith.constant 0 : index
    %c0_41 = arith.constant 0 : index
    %55 = vector.load %arg5[%c0_38, %c1_39, %c0_40, %c0_41] : memref<2x3x2x128xf32, #tpu.memory_space<vmem>>, vector<2x1x2x128xf32>
    %56 = vector.shape_cast %55 : vector<2x1x2x128xf32> to vector<2x2x128xf32>
    %57 = vector.shape_cast %54 : vector<2x2x128xf32> to vector<2x1x2x128xf32>
    tpu.vector_store %arg5[%c0_38, %c1_39, %c0_40, %c0_41], %57 {strides = array<i32>} : memref<2x3x2x128xf32, #tpu.memory_space<vmem>>, vector<2x1x2x128xf32>,
    %c0_42 = arith.constant 0 : index
    %c0_43 = arith.constant 0 : index
    %c0_44 = arith.constant 0 : index
    %c0_45 = arith.constant 0 : index
    %58 = vector.load %arg4[%c0_42, %c0_43, %c0_44, %c0_45] : memref<2x4x2x128xf32, #tpu.memory_space<vmem>>, vector<2x1x2x128xf32>
    %59 = vector.shape_cast %58 : vector<2x1x2x128xf32> to vector<2x2x128xf32>
    %c8 = arith.constant 8 : index
    %60 = memref.load %arg2[%c8] : memref<12xf32, #tpu.memory_space<smem>>
    %61 = vector.broadcast %60 : f32 to vector<2x2x128xf32>
    %62 = arith.mulf %59, %61 : vector<2x2x128xf32>
    %c2_46 = arith.constant 2 : index
    %63 = memref.load %arg3[%c2_46] : memref<3xf32, #tpu.memory_space<smem>>
    %64 = vector.broadcast %63 : f32 to vector<2x2x128xf32>
    %65 = arith.addf %62, %64 : vector<2x2x128xf32>
    %c0_47 = arith.constant 0 : index
    %c1_48 = arith.constant 1 : index
    %c0_49 = arith.constant 0 : index
    %c0_50 = arith.constant 0 : index
    %66 = vector.load %arg4[%c0_47, %c1_48, %c0_49, %c0_50] : memref<2x4x2x128xf32, #tpu.memory_space<vmem>>, vector<2x1x2x128xf32>
    %67 = vector.shape_cast %66 : vector<2x1x2x128xf32> to vector<2x2x128xf32>
    %c9 = arith.constant 9 : index
    %68 = memref.load %arg2[%c9] : memref<12xf32, #tpu.memory_space<smem>>
    %69 = vector.broadcast %68 : f32 to vector<2x2x128xf32>
    %70 = arith.mulf %67, %69 : vector<2x2x128xf32>
    %71 = arith.addf %65, %70 : vector<2x2x128xf32>
    %c0_51 = arith.constant 0 : index
    %c2_52 = arith.constant 2 : index
    %c0_53 = arith.constant 0 : index
    %c0_54 = arith.constant 0 : index
    %72 = vector.load %arg4[%c0_51, %c2_52, %c0_53, %c0_54] : memref<2x4x2x128xf32, #tpu.memory_space<vmem>>, vector<2x1x2x128xf32>
    %73 = vector.shape_cast %72 : vector<2x1x2x128xf32> to vector<2x2x128xf32>
    %c10 = arith.constant 10 : index
    %74 = memref.load %arg2[%c10] : memref<12xf32, #tpu.memory_space<smem>>
    %75 = vector.broadcast %74 : f32 to vector<2x2x128xf32>
    %76 = arith.mulf %73, %75 : vector<2x2x128xf32>
    %77 = arith.addf %71, %76 : vector<2x2x128xf32>
    %c0_55 = arith.constant 0 : index
    %c3_56 = arith.constant 3 : index
    %c0_57 = arith.constant 0 : index
    %c0_58 = arith.constant 0 : index
    %78 = vector.load %arg4[%c0_55, %c3_56, %c0_57, %c0_58] : memref<2x4x2x128xf32, #tpu.memory_space<vmem>>, vector<2x1x2x128xf32>
    %79 = vector.shape_cast %78 : vector<2x1x2x128xf32> to vector<2x2x128xf32>
    %c11 = arith.constant 11 : index
    %80 = memref.load %arg2[%c11] : memref<12xf32, #tpu.memory_space<smem>>
    %81 = vector.broadcast %80 : f32 to vector<2x2x128xf32>
    %82 = arith.mulf %79, %81 : vector<2x2x128xf32>
    %83 = arith.addf %77, %82 : vector<2x2x128xf32>
    %c0_59 = arith.constant 0 : index
    %c2_60 = arith.constant 2 : index
    %c0_61 = arith.constant 0 : index
    %c0_62 = arith.constant 0 : index
    %84 = vector.load %arg5[%c0_59, %c2_60, %c0_61, %c0_62] : memref<2x3x2x128xf32, #tpu.memory_space<vmem>>, vector<2x1x2x128xf32>
    %85 = vector.shape_cast %84 : vector<2x1x2x128xf32> to vector<2x2x128xf32>
    %86 = vector.shape_cast %83 : vector<2x2x128xf32> to vector<2x1x2x128xf32>
    tpu.vector_store %arg5[%c0_59, %c2_60, %c0_61, %c0_62], %86 {strides = array<i32>} : memref<2x3x2x128xf32, #tpu.memory_space<vmem>>, vector<2x1x2x128xf32>,
    return
  }
  func.func @transform_0(%arg0: i32, %arg1: i32, %arg2: memref<12xf32, #tpu.memory_space<smem>>, %arg3: memref<3xf32, #tpu.memory_space<smem>>) -> (i32, i32, i32, i32) {
    %c0_i32 = arith.constant 0 : i32
    %c0_i32_0 = arith.constant 0 : i32
    %c0_i32_1 = arith.constant 0 : i32
    return %arg0, %c0_i32, %arg1, %c0_i32_0 : i32, i32, i32, i32
  }
  func.func @transform_1(%arg0: i32, %arg1: i32, %arg2: memref<12xf32, #tpu.memory_space<smem>>, %arg3: memref<3xf32, #tpu.memory_space<smem>>) -> (i32, i32, i32, i32) {
    %c0_i32 = arith.constant 0 : i32
    %c0_i32_0 = arith.constant 0 : i32
    %c0_i32_1 = arith.constant 0 : i32
    return %arg0, %c0_i32, %arg1, %c0_i32_0 : i32, i32, i32, i32
  }
}

</mosaic_0001>

<llo_original>
// kernel: tpu_custom_call.1
$region0: #{tpu_custom_call.1}
  #allocation0 [shape = 'u32[]', space=smem, size = 0x4, offset = 0x4, fixed_abs, tag = 'smem constant byte address 0x4 - core index']
  #allocation1 [shape = 'u32[144,128]{1,0:T(1,128)}', space=vmem, size = 0x12000, scoped, tag = 'internal scratch']
  #allocation2 [shape = 's32[1]{0}', space=sflag, size = 0x4, scoped, tag = 'scoped memory for tpu_custom_call.1']
  #allocation3 [shape = 'u8[512]{0}', space=smem, size = 0x200, scoped, tag = 'prefetched SMEM operand 0']
  #allocation4 [shape = 'u8[512]{0}', space=smem, size = 0x200, scoped, tag = 'prefetched SMEM operand 1']
  %s0 = inlined_call_operand.hbm [shape: f32[12], index: 0, kind: input, shape index: {}]
  %s1 = inlined_call_operand.vmem [shape: f32[3], index: 1, kind: input, shape index: {}]
  %s2 = inlined_call_operand.hbm [shape: f32[2,4,2,128], index: 2, kind: input, shape index: {}]
  %s3 = inlined_call_operand.hbm [shape: f32[2,3,2,128], index: 3, kind: output, shape index: {}]
  %s4 = sld [smem:[#allocation0]]
  $region18: #{tpu_custom_call.1} parent=0
    _
  %s6 = ssub.s32 1, %s4
  %s7 = scalar_select 0, %s6, %s4
  %9 = dma.hbm_to_smem %s0, 16, [#allocation3], [#allocation2]
  %s10 = sshll.u32 %s1, 4
  %s11 = int_to_ptr.vmem [resolvable:$true] %s10
  %13 = dma.vmem_to_smem %s11, 16, [#allocation4], [#allocation2]
  %14 = dma.done [#allocation2], 32
  %15 = sfence
  $region1: #{tpu_custom_call.1} parent=0
    #allocation5 [shape = 'u8[8192]{0}', space=vmem, size = 0x2000, scoped, tag = 'input window, operand 2, single buffered']
    #allocation6 [shape = 's32[1]{0}', space=sflag, size = 0x4, scoped, tag = 'scoped memory for tpu_custom_call.1']
    #allocation7 [shape = 's32[1]{0}', space=sflag, size = 0x4, scoped, tag = 'scoped memory for tpu_custom_call.1']
    #allocation8 [shape = 'u8[6144]{0}', space=vmem, size = 0x1800, scoped, tag = 'output window, operand 0, single buffered']
    %16 = vsyncpa [#allocation6], 0
    %17 = vsyncpa [#allocation7], 0
    // Predicated region
    $region2: #{tpu_custom_call.1} parent=1 // pred_check
      _
    $region3: #{tpu_custom_call.1} parent=1 // pred_check_branch
      %19 = sbr.rel (0) target = $region5
    $region4: #{tpu_custom_call.1} parent=1 // pred_region
      %s21 = ssub.s32 256, 256
      %22 = vsyncadd [#allocation6], %s21
      %s23 = sshll.u32 [#allocation5], 4
      %s24 = int_to_ptr.vmem [resolvable:$true] %s23
      %29 = dma.hbm_to_vmem [thread:$0]  %s2, 256, %s24, [#allocation6], 32, 32, 2
    $region5: #{tpu_custom_call.1} parent=1 // pred_fallthru
      _
    // Predicated region
    $region6: #{tpu_custom_call.1} parent=1 // pred_check
      _
    $region7: #{tpu_custom_call.1} parent=1 // pred_check_branch
      %31 = sbr.rel (0) target = $region9
    $region8: #{tpu_custom_call.1} parent=1 // pred_region
      %32 = dma.done [#allocation6], 256
    $region9: #{tpu_custom_call.1} parent=1 // pred_fallthru
      _
    %v33 = vld [vmem:[#allocation5] sm:$0x3]
    %v34 = vld [vmem:[#allocation5 + $0x8] sm:$0x3]
    %s35 = sld [smem:[#allocation3]]
    %v36 = vstv %s35
    %v37 = vmul.f32 %v33, %v36
    %v38 = vmul.f32 %v34, %v36
    %s39 = sld [smem:[#allocation4]]
    %v40 = vstv %s39
    %v41 = vadd.f32 %v37, %v40
    %v42 = vadd.f32 %v38, %v40
    %s43 = scalar_lea.vmem [#allocation5], 2
    %v44 = vld [vmem:[%s43] sm:$0x3]
    %v45 = vld [vmem:[%s43 + $0x8] sm:$0x3]
    %s46 = sld [smem:[#allocation3 + $0x1]]
    %v47 = vstv %s46
    %v48 = vmul.f32 %v44, %v47
    %v49 = vmul.f32 %v45, %v47
    %v50 = vadd.f32 %v41, %v48
    %v51 = vadd.f32 %v42, %v49
    %s52 = scalar_lea.vmem [#allocation5], 4
    %v53 = vld [vmem:[%s52] sm:$0x3]
    %v54 = vld [vmem:[%s52 + $0x8] sm:$0x3]
    %s55 = sld [smem:[#allocation3 + $0x2]]
    %v56 = vstv %s55
    %v57 = vmul.f32 %v53, %v56
    %v58 = vmul.f32 %v54, %v56
    %v59 = vadd.f32 %v50, %v57
    %v60 = vadd.f32 %v51, %v58
    %s61 = scalar_lea.vmem [#allocation5], 6
    %v62 = vld [vmem:[%s61] sm:$0x3]
    %v63 = vld [vmem:[%s61 + $0x8] sm:$0x3]
    %s64 = sld [smem:[#allocation3 + $0x3]]
    %v65 = vstv %s64
    %v66 = vmul.f32 %v62, %v65
    %v67 = vmul.f32 %v63, %v65
    %v68 = vadd.f32 %v59, %v66
    %v69 = vadd.f32 %v60, %v67
    %70 = vst [vmem:[#allocation8] sm:$0x3] %v68
    %71 = vst [vmem:[#allocation8 + $0x6] sm:$0x3] %v69
    %v72 = vld [vmem:[#allocation5] sm:$0x3]
    %v73 = vld [vmem:[#allocation5 + $0x8] sm:$0x3]
    %s74 = sld [smem:[#allocation3 + $0x4]]
    %v75 = vstv %s74
    %v76 = vmul.f32 %v72, %v75
    %v77 = vmul.f32 %v73, %v75
    %s78 = sld [smem:[#allocation4 + $0x1]]
    %v79 = vstv %s78
    %v80 = vadd.f32 %v76, %v79
    %v81 = vadd.f32 %v77, %v79
    %v82 = vld [vmem:[%s43] sm:$0x3]
    %v83 = vld [vmem:[%s43 + $0x8] sm:$0x3]
    %s84 = sld [smem:[#allocation3 + $0x5]]
    %v85 = vstv %s84
    %v86 = vmul.f32 %v82, %v85
    %v87 = vmul.f32 %v83, %v85
    %v88 = vadd.f32 %v80, %v86
    %v89 = vadd.f32 %v81, %v87
    %v90 = vld [vmem:[%s52] sm:$0x3]
    %v91 = vld [vmem:[%s52 + $0x8] sm:$0x3]
    %s92 = sld [smem:[#allocation3 + $0x6]]
    %v93 = vstv %s92
    %v94 = vmul.f32 %v90, %v93
    %v95 = vmul.f32 %v91, %v93
    %v96 = vadd.f32 %v88, %v94
    %v97 = vadd.f32 %v89, %v95
    %v98 = vld [vmem:[%s61] sm:$0x3]
    %v99 = vld [vmem:[%s61 + $0x8] sm:$0x3]
    %s100 = sld [smem:[#allocation3 + $0x7]]
    %v101 = vstv %s100
    %v102 = vmul.f32 %v98, %v101
    %v103 = vmul.f32 %v99, %v101
    %v104 = vadd.f32 %v96, %v102
    %v105 = vadd.f32 %v97, %v103
    %s106 = scalar_lea.vmem [#allocation8], 2
    %107 = vst [vmem:[%s106] sm:$0x3] %v104
    %108 = vst [vmem:[%s106 + $0x6] sm:$0x3] %v105
    %v109 = vld [vmem:[#allocation5] sm:$0x3]
    %v110 = vld [vmem:[#allocation5 + $0x8] sm:$0x3]
    %s111 = sld [smem:[#allocation3 + $0x8]]
    %v112 = vstv %s111
    %v113 = vmul.f32 %v109, %v112
    %v114 = vmul.f32 %v110, %v112
    %s115 = sld [smem:[#allocation4 + $0x2]]
    %v116 = vstv %s115
    %v117 = vadd.f32 %v113, %v116
    %v118 = vadd.f32 %v114, %v116
    %v119 = vld [vmem:[%s43] sm:$0x3]
    %v120 = vld [vmem:[%s43 + $0x8] sm:$0x3]
    %s121 = sld [smem:[#allocation3 + $0x9]]
    %v122 = vstv %s121
    %v123 = vmul.f32 %v119, %v122
    %v124 = vmul.f32 %v120, %v122
    %v125 = vadd.f32 %v117, %v123
    %v126 = vadd.f32 %v118, %v124
    %v127 = vld [vmem:[%s52] sm:$0x3]
    %v128 = vld [vmem:[%s52 + $0x8] sm:$0x3]
    %s129 = sld [smem:[#allocation3 + $0xa]]
    %v130 = vstv %s129
    %v131 = vmul.f32 %v127, %v130
    %v132 = vmul.f32 %v128, %v130
    %v133 = vadd.f32 %v125, %v131
    %v134 = vadd.f32 %v126, %v132
    %v135 = vld [vmem:[%s61] sm:$0x3]
    %v136 = vld [vmem:[%s61 + $0x8] sm:$0x3]
    %s137 = sld [smem:[#allocation3 + $0xb]]
    %v138 = vstv %s137
    %v139 = vmul.f32 %v135, %v138
    %v140 = vmul.f32 %v136, %v138
    %v141 = vadd.f32 %v133, %v139
    %v142 = vadd.f32 %v134, %v140
    %s143 = scalar_lea.vmem [#allocation8], 4
    %144 = vst [vmem:[%s143] sm:$0x3] %v141
    %145 = vst [vmem:[%s143 + $0x6] sm:$0x3] %v142
    // Predicated region
    $region10: #{tpu_custom_call.1} parent=1 // pred_check
      _
    $region11: #{tpu_custom_call.1} parent=1 // pred_check_branch
      %147 = sbr.rel (0) target = $region13
    $region12: #{tpu_custom_call.1} parent=1 // pred_region
      %s149 = ssub.s32 192, 192
      %150 = vsyncadd [#allocation7], %s149
      %s151 = sshll.u32 [#allocation8], 4
      %s152 = int_to_ptr.vmem [resolvable:$true] %s151
      %157 = dma.vmem_to_hbm [thread:$0]  %s152, 192, %s3, [#allocation7], 32, 32, 2
    $region13: #{tpu_custom_call.1} parent=1 // pred_fallthru
      _
    // Predicated region
    $region14: #{tpu_custom_call.1} parent=1 // pred_check
      _
    $region15: #{tpu_custom_call.1} parent=1 // pred_check_branch
      %159 = sbr.rel (0) target = $region17
    $region16: #{tpu_custom_call.1} parent=1 // pred_region
      %160 = dma.done [#allocation7], 192
    $region17: #{tpu_custom_call.1} parent=1 // pred_fallthru
      _
    %161 = vsyncpa [#allocation6], 1
    %162 = vsyncpa [#allocation7], 1

</llo_original>
